<compile_context>
chip_gen: v5e
topology: v5e:2x2
jax: 0.10.0
libtpu: 0.0.40
codegen_flags: <defaults>
</compile_context>

<pallas_src>
import functools

import jax
import jax.numpy as jnp
from jax.experimental import pallas as pl
from jax.experimental.pallas import tpu as pltpu


_VMEM_LIMIT_BYTES = 32 * 1024 * 1024


def _round_up(x, m):
    return ((x + m - 1) // m) * m


def _pad2(x, rows, cols):
    r, c = x.shape
    return jnp.pad(x, ((0, rows - r), (0, cols - c)))


def _pick_tile(n, target=256):
    """Largest multiple of 128 <= target that divides n, else n (full dim)."""
    if n <= target:
        return n
    t = (min(target, n) // 128) * 128
    while t >= 128:
        if n % t == 0:
            return t
        t -= 128
    return n  # fallback: whole dimension as one block


# ----------------------------- Fused MLP kernel ------------------------------
# One pallas_call computes every Linear layer for a tile of node rows.
# Outputs: stacked pre-activations of the hidden layers (for h_list) and the
# final layer output (propagation input). The hidden pre-activation is computed
# ONCE and relu'd in-register (no duplicate matmul).

def _mlp_kernel(x_ref, w_ref, b_ref, *out_refs, num_layers):
    hpre_ref = out_refs[0] if num_layers > 1 else None
    h_ref = out_refs[-1]
    h = x_ref[...].astype(jnp.bfloat16)              # (tm, Fp)
    for l in range(num_layers):                      # static unrolled loop
        y = jnp.dot(h, w_ref[l], preferred_element_type=jnp.float32)
        y = y + b_ref[l]                             # (tm, Fp) f32
        if l < num_layers - 1:
            hpre_ref[l, :, :] = y                    # pre-activation for h_list
            h = jnp.maximum(y, 0.0).astype(jnp.bfloat16)
        else:
            h_ref[...] = y


def mlp_forward(xp, w_all_bf16, b_all, num_layers):
    n, fp = xp.shape
    tm = _pick_tile(n, 256)
    n_i = n // tm
    num_hidden = num_layers - 1

    out_shapes = []
    out_specs = []
    if num_hidden > 0:
        out_shapes.append(jax.ShapeDtypeStruct((num_hidden, n, fp), jnp.float32))
        out_specs.append(pl.BlockSpec((num_hidden, tm, fp), lambda i: (0, i, 0)))
    out_shapes.append(jax.ShapeDtypeStruct((n, fp), jnp.float32))
    out_specs.append(pl.BlockSpec((tm, fp), lambda i: (i, 0)))

    flops = 2 * n * fp * fp * num_layers
    bytes_acc = n * fp * 4 * (1 + num_layers) + num_layers * fp * fp * 2

    res = pl.pallas_call(
        functools.partial(_mlp_kernel, num_layers=num_layers),
        out_shape=tuple(out_shapes),
        grid_spec=pltpu.PrefetchScalarGridSpec(
            num_scalar_prefetch=0,
            grid=(n_i,),
            in_specs=[
                pl.BlockSpec((tm, fp), lambda i: (i, 0)),
                pl.BlockSpec((num_layers, fp, fp), lambda i: (0, 0, 0)),
                pl.BlockSpec((num_layers, 1, fp), lambda i: (0, 0, 0)),
            ],
            out_specs=tuple(out_specs),
        ),
        compiler_params=pltpu.CompilerParams(
            dimension_semantics=("parallel",),
            vmem_limit_bytes=_VMEM_LIMIT_BYTES),
        cost_estimate=pl.CostEstimate(flops=int(flops), transcendentals=0,
                                      bytes_accessed=int(bytes_acc)),
    )(xp, w_all_bf16, b_all)
    return res


# ----------------------------- APPNP propagation -----------------------------
# h_{t+1} = (1-alpha) * A_hat @ h_t + alpha * h_0,  t = 0..K-1

def _appnp_small_kernel(a_ref, h0_ref, o_ref, *, k, alpha):
    # Whole A (bf16) and h0 resident; K unrolled so the scheduler sees across
    # iterations; alpha*h0 hoisted out of the loop.
    a = a_ref[...]                                  # (n, n) bf16
    h0 = h0_ref[...]                                # (n, Fp) f32
    h0a = alpha * h0
    h = h0
    for _ in range(k):
        ah = jnp.dot(a, h.astype(jnp.bfloat16), preferred_element_type=jnp.float32)
        h = (1.0 - alpha) * ah + h0a
    o_ref[...] = h.astype(o_ref.dtype)


def appnp_propagate_small(a_bf16, h0p, k, alpha):
    n = a_bf16.shape[0]
    fp = h0p.shape[1]
    return pl.pallas_call(
        functools.partial(_appnp_small_kernel, k=k, alpha=alpha),
        out_shape=jax.ShapeDtypeStruct((n, fp), jnp.float32),
        grid_spec=pltpu.PrefetchScalarGridSpec(
            num_scalar_prefetch=0,
            grid=(1,),
            in_specs=[pl.BlockSpec((n, n), lambda i: (0, 0)),
                      pl.BlockSpec((n, fp), lambda i: (0, 0))],
            out_specs=pl.BlockSpec((n, fp), lambda i: (0, 0)),
        ),
        compiler_params=pltpu.CompilerParams(
            dimension_semantics=("arbitrary",),
            vmem_limit_bytes=_VMEM_LIMIT_BYTES),
        cost_estimate=pl.CostEstimate(flops=int(2 * k * n * n * fp),
                                      transcendentals=0,
                                      bytes_accessed=int(n * n * 2 + 2 * n * fp * 4)),
    )(a_bf16, h0p)


def _appnp_tiled_kernel(a_ref, h0_ref, o_ref, h_cur, h_nxt, h0a, acc, *,
                        alpha, tm, tn, n_i, n_j):
    # grid = (K, row_tiles, col_tiles); A streamed in (tm, tn) bf16 tiles,
    # h / h0 / alpha*h0 resident in VMEM scratch across the whole grid.
    t = pl.program_id(0)
    i = pl.program_id(1)
    j = pl.program_id(2)

    @pl.when((t == 0) & (i == 0) & (j == 0))
    def _init():
        h0 = h0_ref[...]
        h_cur[...] = h0
        h0a[...] = alpha * h0           # hoisted alpha*h0 (computed once)

    @pl.when(j == 0)
    def _zero():
        acc[...] = jnp.zeros_like(acc)

    col0 = pl.multiple_of(j * tn, tn)
    hj = h_cur[pl.ds(col0, tn), :].astype(jnp.bfloat16)
    acc[...] += jnp.dot(a_ref[...], hj, preferred_element_type=jnp.float32)

    @pl.when(j == n_j - 1)
    def _finalize():
        row0 = pl.multiple_of(i * tm, tm)
        res = (1.0 - alpha) * acc[...] + h0a[pl.ds(row0, tm), :]
        h_nxt[pl.ds(row0, tm), :] = res
        o_ref[...] = res.astype(o_ref.dtype)

    @pl.when((j == n_j - 1) & (i == n_i - 1))
    def _advance():                      # end of step t: h_cur <- h_{t+1}
        h_cur[...] = h_nxt[...]


def appnp_propagate_tiled(a_bf16, h0p, k, alpha, tile_target=256):
    n = a_bf16.shape[0]
    fp = h0p.shape[1]
    tm = _pick_tile(n, tile_target)
    tn = _pick_tile(n, tile_target)
    n_i, n_j = n // tm, n // tn
    return pl.pallas_call(
        functools.partial(_appnp_tiled_kernel, alpha=alpha, tm=tm, tn=tn,
                          n_i=n_i, n_j=n_j),
        out_shape=jax.ShapeDtypeStruct((n, fp), jnp.float32),
        grid_spec=pltpu.PrefetchScalarGridSpec(
            num_scalar_prefetch=0,
            grid=(k, n_i, n_j),
            in_specs=[pl.BlockSpec((tm, tn), lambda t, i, j: (i, j)),
                      pl.BlockSpec((n, fp), lambda t, i, j: (0, 0))],
            out_specs=pl.BlockSpec((tm, fp), lambda t, i, j: (i, 0)),
            scratch_shapes=[pltpu.VMEM((n, fp), jnp.float32),   # h_cur
                            pltpu.VMEM((n, fp), jnp.float32),   # h_nxt
                            pltpu.VMEM((n, fp), jnp.float32),   # alpha*h0
                            pltpu.VMEM((tm, fp), jnp.float32)], # acc
        ),
        compiler_params=pltpu.CompilerParams(
            dimension_semantics=("arbitrary", "arbitrary", "arbitrary"),
            vmem_limit_bytes=_VMEM_LIMIT_BYTES),
        cost_estimate=pl.CostEstimate(flops=int(2 * k * n * n * fp),
                                      transcendentals=0,
                                      bytes_accessed=int(k * n * n * 2 + 2 * n * fp * 4)),
    )(a_bf16, h0p)


def appnp_propagate(a_hat, h0p, k, alpha):
    if k == 0:
        return h0p
    a_bf16 = a_hat.astype(jnp.bfloat16)
    n = a_hat.shape[0]
    if n <= 1024:          # whole bf16 A (<=2 MiB) comfortably VMEM-resident
        return appnp_propagate_small(a_bf16, h0p, k, alpha)
    return appnp_propagate_tiled(a_bf16, h0p, k, alpha)


# ----------------------------- Model wrapper ---------------------------------

def init_params(key, num_layers, input_dim, hidden_dim, output_dim):
    """Deterministic nn.Linear-style init (uniform(-1/sqrt(fan_in), +))."""
    if num_layers == 1:
        dims = [(input_dim, output_dim)]
    else:
        dims = [(input_dim, hidden_dim)]
        dims += [(hidden_dim, hidden_dim)] * (num_layers - 2)
        dims += [(hidden_dim, output_dim)]
    params = []
    for (fin, fout) in dims:
        key, kw, kb = jax.random.split(key, 3)
        bound = 1.0 / jnp.sqrt(fin)
        w = jax.random.uniform(kw, (fin, fout), jnp.float32, -bound, bound)
        b = jax.random.uniform(kb, (fout,), jnp.float32, -bound, bound)
        params.append((w, b))
    return params


def appnp_forward(a_hat, feats, params, *, k=10, alpha=0.1):
    num_layers = len(params)
    n, in_dim = feats.shape
    dims = [in_dim] + [w.shape[1] for (w, _) in params]
    fp = _round_up(max(max(dims), 128), 128)        # lane-dense padded feature dim

    xp = _pad2(feats.astype(jnp.float32), n, fp)
    w_all = jnp.stack([_pad2(w, fp, fp) for (w, _) in params]).astype(jnp.bfloat16)
    b_all = jnp.stack([jnp.pad(b, (0, fp - b.shape[0]))[None, :]
                       for (_, b) in params]).astype(jnp.float32)

    mlp_outs = mlp_forward(xp, w_all, b_all, num_layers)
    if num_layers > 1:
        hpre_all, h_last_p = mlp_outs
        h_list = [hpre_all[l, :, :params[l][0].shape[1]]
                  for l in range(num_layers - 1)]
    else:
        h_last_p = mlp_outs[0]
        h_list = []

    h_prop_p = appnp_propagate(a_hat, h_last_p, k, alpha)
    out_dim = params[-1][0].shape[1]
    return h_list, h_prop_p[:, :out_dim]


def reference_forward(a_hat, feats, params, k, alpha):
    """Pure-JAX f32 reference matching the PyTorch module (eval mode)."""
    num_layers = len(params)
    h = feats
    h_list = []
    for l, (w, b) in enumerate(params):
        h = h @ w + b
        if l != num_layers - 1:
            h_list.append(h)
            h = jnp.maximum(h, 0.0)
    h0 = h
    for _ in range(k):
        h = (1.0 - alpha) * (a_hat @ h) + alpha * h0
    return h_list, h


def build_normalized_adjacency(key, n):
    """Random undirected graph -> symmetric norm D^{-1/2} A D^{-1/2}."""
    m = jax.random.uniform(key, (n, n))
    a = (m < 0.15).astype(jnp.float32)
    a = jnp.maximum(a, a.T)
    a = a * (1.0 - jnp.eye(n))
    deg = jnp.sum(a, axis=1)
    d_inv_sqrt = jnp.where(deg > 0, 1.0 / jnp.sqrt(jnp.maximum(deg, 1e-12)), 0.0)
    return a * d_inv_sqrt[:, None] * d_inv_sqrt[None, :]


if __name__ == "__main__":
    key = jax.random.PRNGKey(0)
    k_graph, k_feat, k_param = jax.random.split(key, 3)

    N = 64
    INPUT_DIM = 32
    HIDDEN_DIM = 32
    OUTPUT_DIM = 16
    NUM_LAYERS = 2
    K = 10
    ALPHA = 0.1

    a_hat = build_normalized_adjacency(k_graph, N)
    feats = jax.random.normal(k_feat, (N, INPUT_DIM), jnp.float32)
    params = init_params(k_param, NUM_LAYERS, INPUT_DIM, HIDDEN_DIM, OUTPUT_DIM)

    h_list, h = appnp_forward(a_hat, feats, params, k=K, alpha=ALPHA)
    jax.block_until_ready(h)
    for hh in h_list:
        jax.block_until_ready(hh)

    assert h.shape == (N, OUTPUT_DIM)
    assert len(h_list) == NUM_LAYERS - 1 and h_list[0].shape == (N, HIDDEN_DIM)

    # Correctness vs f32 reference (bf16 matmuls -> loose tolerance).
    h_list_ref, h_ref = reference_forward(a_hat, feats, params, K, ALPHA)
    for hp, hr in zip(h_list, h_list_ref):
        assert jnp.allclose(hp, hr, atol=5e-2, rtol=5e-2)
    assert jnp.allclose(h, h_ref, atol=5e-2, rtol=5e-2)

    # Exercise + validate the tiled (A-streaming) propagation path with a
    # genuinely multi-tile grid (256 nodes -> 2x2 tiles of 128).
    n2 = 256
    k_a2, k_h2 = jax.random.split(jax.random.PRNGKey(1))
    a2 = build_normalized_adjacency(k_a2, n2)
    h02 = jax.random.normal(k_h2, (n2, 128), jnp.float32)
    h2 = appnp_propagate_tiled(a2.astype(jnp.bfloat16), h02, K, ALPHA,
                               tile_target=128)
    jax.block_until_ready(h2)
    h2_ref = h02
    for _ in range(K):
        h2_ref = (1.0 - ALPHA) * (a2 @ h2_ref) + ALPHA * h02
    assert jnp.allclose(h2, h2_ref, atol=5e-2, rtol=5e-2)

    print("KERNEL_OK")
</pallas_src>

<mosaic_0001>
module attributes {stable_mosaic.version = 11 : i64} {
  func.func @_mlp_kernel(%arg0: i32, %arg1: memref<64x128xf32, #tpu.memory_space<vmem>>, %arg2: memref<2x128x128xbf16, #tpu.memory_space<vmem>>, %arg3: memref<2x1x128xf32, #tpu.memory_space<vmem>>, %arg4: memref<1x64x128xf32, #tpu.memory_space<vmem>>, %arg5: memref<64x128xf32, #tpu.memory_space<vmem>>) attributes {dimension_semantics = [#tpu.dimension_semantics<parallel>], iteration_bounds = array<i64: 1>, scalar_prefetch = 0 : i64, scratch_operands = 0 : i64, tpu.core_type = #tpu.core_type<tc>, window_params = [{transform_indices = @transform_0, window_bounds = array<i64: 64, 128>}, {pipeline_mode = #tpu.pipeline_mode<synchronous>, transform_indices = @transform_1, window_bounds = array<i64: 2, 128, 128>}, {pipeline_mode = #tpu.pipeline_mode<synchronous>, transform_indices = @transform_2, window_bounds = array<i64: 2, 1, 128>}, {transform_indices = @transform_3, window_bounds = array<i64: 1, 64, 128>}, {transform_indices = @transform_4, window_bounds = array<i64: 64, 128>}]} {
    %c0 = arith.constant 0 : index
    %c0_0 = arith.constant 0 : index
    %0 = vector.load %arg1[%c0, %c0_0] : memref<64x128xf32, #tpu.memory_space<vmem>>, vector<64x128xf32>
    %1 = arith.truncf %0 : vector<64x128xf32> to vector<64x128xbf16>
    %c0_1 = arith.constant 0 : index
    %c0_2 = arith.constant 0 : index
    %c0_3 = arith.constant 0 : index
    %2 = vector.load %arg2[%c0_1, %c0_2, %c0_3] : memref<2x128x128xbf16, #tpu.memory_space<vmem>>, vector<1x128x128xbf16>
    %3 = vector.shape_cast %2 : vector<1x128x128xbf16> to vector<128x128xbf16>
    %cst = arith.constant dense<0.000000e+00> : vector<64x128xf32>
    %4 = tpu.matmul %1, %3, %cst {dimension_numbers = #tpu.dot_dimension_numbers<[1], [0], [0], [1], [0, 0, 1, 1], [], []>} : vector<64x128xbf16>, vector<128x128xbf16>, vector<64x128xf32> -> vector<64x128xf32>
    %c0_4 = arith.constant 0 : index
    %c0_5 = arith.constant 0 : index
    %c0_6 = arith.constant 0 : index
    %5 = vector.load %arg3[%c0_4, %c0_5, %c0_6] : memref<2x1x128xf32, #tpu.memory_space<vmem>>, vector<1x1x128xf32>
    %6 = vector.shape_cast %5 : vector<1x1x128xf32> to vector<1x128xf32>
    %7 = vector.broadcast %6 : vector<1x128xf32> to vector<64x128xf32>
    %8 = arith.addf %4, %7 : vector<64x128xf32>
    %c0_7 = arith.constant 0 : index
    %c0_8 = arith.constant 0 : index
    %c0_9 = arith.constant 0 : index
    %9 = vector.load %arg4[%c0_7, %c0_8, %c0_9] : memref<1x64x128xf32, #tpu.memory_space<vmem>>, vector<1x64x128xf32>
    %10 = vector.shape_cast %9 : vector<1x64x128xf32> to vector<64x128xf32>
    %11 = vector.shape_cast %8 : vector<64x128xf32> to vector<1x64x128xf32>
    tpu.vector_store %arg4[%c0_7, %c0_8, %c0_9], %11 {strides = array<i32>} : memref<1x64x128xf32, #tpu.memory_space<vmem>>, vector<1x64x128xf32>,
    %cst_10 = arith.constant 0.000000e+00 : f32
    %12 = vector.broadcast %cst_10 : f32 to vector<64x128xf32>
    %13 = arith.maximumf %8, %12 : vector<64x128xf32>
    %14 = arith.truncf %13 : vector<64x128xf32> to vector<64x128xbf16>
    %c1 = arith.constant 1 : index
    %c0_11 = arith.constant 0 : index
    %c0_12 = arith.constant 0 : index
    %15 = vector.load %arg2[%c1, %c0_11, %c0_12] : memref<2x128x128xbf16, #tpu.memory_space<vmem>>, vector<1x128x128xbf16>
    %16 = vector.shape_cast %15 : vector<1x128x128xbf16> to vector<128x128xbf16>
    %cst_13 = arith.constant dense<0.000000e+00> : vector<64x128xf32>
    %17 = tpu.matmul %14, %16, %cst_13 {dimension_numbers = #tpu.dot_dimension_numbers<[1], [0], [0], [1], [0, 0, 1, 1], [], []>} : vector<64x128xbf16>, vector<128x128xbf16>, vector<64x128xf32> -> vector<64x128xf32>
    %c1_14 = arith.constant 1 : index
    %c0_15 = arith.constant 0 : index
    %c0_16 = arith.constant 0 : index
    %18 = vector.load %arg3[%c1_14, %c0_15, %c0_16] : memref<2x1x128xf32, #tpu.memory_space<vmem>>, vector<1x1x128xf32>
    %19 = vector.shape_cast %18 : vector<1x1x128xf32> to vector<1x128xf32>
    %20 = vector.broadcast %19 : vector<1x128xf32> to vector<64x128xf32>
    %21 = arith.addf %17, %20 : vector<64x128xf32>
    %c0_17 = arith.constant 0 : index
    %c0_18 = arith.constant 0 : index
    %22 = vector.load %arg5[%c0_17, %c0_18] : memref<64x128xf32, #tpu.memory_space<vmem>>, vector<64x128xf32>
    tpu.vector_store %arg5[%c0_17, %c0_18], %21 {strides = array<i32>} : memref<64x128xf32, #tpu.memory_space<vmem>>, vector<64x128xf32>,
    return
  }
  func.func @transform_0(%arg0: i32) -> (i32, i32) {
    %c0_i32 = arith.constant 0 : i32
    %c0_i32_0 = arith.constant 0 : i32
    return %arg0, %c0_i32 : i32, i32
  }
  func.func @transform_1(%arg0: i32) -> (i32, i32, i32) {
    %c0_i32 = arith.constant 0 : i32
    %c0_i32_0 = arith.constant 0 : i32
    %c0_i32_1 = arith.constant 0 : i32
    %c0_i32_2 = arith.constant 0 : i32
    return %c0_i32, %c0_i32_0, %c0_i32_1 : i32, i32, i32
  }
  func.func @transform_2(%arg0: i32) -> (i32, i32, i32) {
    %c0_i32 = arith.constant 0 : i32
    %c0_i32_0 = arith.constant 0 : i32
    %c0_i32_1 = arith.constant 0 : i32
    %c0_i32_2 = arith.constant 0 : i32
    return %c0_i32, %c0_i32_0, %c0_i32_1 : i32, i32, i32
  }
  func.func @transform_3(%arg0: i32) -> (i32, i32, i32) {
    %c0_i32 = arith.constant 0 : i32
    %c0_i32_0 = arith.constant 0 : i32
    %c0_i32_1 = arith.constant 0 : i32
    return %c0_i32, %arg0, %c0_i32_0 : i32, i32, i32
  }
  func.func @transform_4(%arg0: i32) -> (i32, i32) {
    %c0_i32 = arith.constant 0 : i32
    %c0_i32_0 = arith.constant 0 : i32
    return %arg0, %c0_i32 : i32, i32
  }
}

</mosaic_0001>

<llo_original>
// kernel: tpu_custom_call.1
$region0: #{tpu_custom_call.1}
  #allocation0 [shape = 'u32[]', space=smem, size = 0x4, offset = 0x4, fixed_abs, tag = 'smem constant byte address 0x4 - core index']
  #allocation1 [shape = 'u32[72,128]{1,0:T(1,128)}', space=vmem, size = 0x9000, scoped, tag = 'internal scratch']
  %s0 = inlined_call_operand.hbm [shape: f32[64,128], index: 0, kind: input, shape index: {}]
  %s1 = inlined_call_operand.hbm [shape: bf16[2,128,128], index: 1, kind: input, shape index: {}]
  %s2 = inlined_call_operand.hbm [shape: f32[2,1,128], index: 2, kind: input, shape index: {}]
  %s3 = inlined_call_operand.hbm [shape: f32[1,64,128], index: 3, kind: output, shape index: {0}]
  %s4 = inlined_call_operand.hbm [shape: f32[64,128], index: 4, kind: output, shape index: {1}]
  %5 = xla_tuple %s3, %s4
  %s6 = sld [smem:[#allocation0]]
  $region42: #{tpu_custom_call.1} parent=0
    _
  %s8 = ssub.s32 1, %s6
  %s9 = scalar_select 0, %s8, %s6
  $region1: #{tpu_custom_call.1} parent=0
    #allocation2 [shape = 'u8[32768]{0}', space=vmem, size = 0x8000, scoped, tag = 'input window, operand 0, single buffered']
    #allocation3 [shape = 's32[1]{0}', space=sflag, size = 0x4, scoped, tag = 'scoped memory for tpu_custom_call.1']
    #allocation4 [shape = 's32[1]{0}', space=sflag, size = 0x4, scoped, tag = 'scoped memory for tpu_custom_call.1']
    #allocation5 [shape = 'u8[65536]{0}', space=vmem, size = 0x10000, scoped, tag = 'input window, operand 1, single buffered']
    #allocation6 [shape = 's32[1]{0}', space=sflag, size = 0x4, scoped, tag = 'scoped memory for tpu_custom_call.1']
    #allocation7 [shape = 'u8[1024]{0}', space=vmem, size = 0x400, scoped, tag = 'input window, operand 2, single buffered']
    #allocation8 [shape = 'u8[32768]{0}', space=vmem, size = 0x8000, scoped, tag = 'output window, operand 0, single buffered']
    #allocation9 [shape = 'u8[32768]{0}', space=vmem, size = 0x8000, scoped, tag = 'output window, operand 1, single buffered']
    #allocation10 [shape = 's32[1]{0}', space=sflag, size = 0x4, scoped, tag = 'scoped memory for tpu_custom_call.1']
    %10 = vsyncpa [#allocation3], 0
    %11 = vsyncpa [#allocation6], 0
    %12 = vsyncpa [#allocation4], 0
    %13 = vsyncpa [#allocation10], 0
    // Predicated region
    $region2: #{tpu_custom_call.1} parent=1 // pred_check
      _
    $region3: #{tpu_custom_call.1} parent=1 // pred_check_branch
      %15 = sbr.rel (0) target = $region5
    $region4: #{tpu_custom_call.1} parent=1 // pred_region
      %17 = vsyncadd [#allocation3], 0
      %s18 = sshll.u32 %s0, 4
      %s19 = int_to_ptr.hbm [resolvable:$true] %s18
      %s20 = sshll.u32 [#allocation2], 4
      %s21 = int_to_ptr.vmem [resolvable:$true] %s20
      %26 = dma.hbm_to_vmem [thread:$0]  %s19, 1024, %s21, [#allocation3], 128, 128, 8
    $region5: #{tpu_custom_call.1} parent=1 // pred_fallthru
      _
    // Predicated region
    $region6: #{tpu_custom_call.1} parent=1 // pred_check
      _
    $region7: #{tpu_custom_call.1} parent=1 // pred_check_branch
      %28 = sbr.rel (0) target = $region9
    $region8: #{tpu_custom_call.1} parent=1 // pred_region
      %30 = vsyncadd [#allocation6], 0
      %s31 = sshll.u32 %s1, 4
      %s32 = int_to_ptr.hbm [resolvable:$true] %s31
      %s33 = sshll.u32 [#allocation5], 4
      %s34 = int_to_ptr.vmem [resolvable:$true] %s33
      %39 = dma.hbm_to_vmem [thread:$0]  %s32, 2048, %s34, [#allocation6], 64, 64, 4
    $region9: #{tpu_custom_call.1} parent=1 // pred_fallthru
      _
    // Predicated region
    $region10: #{tpu_custom_call.1} parent=1 // pred_check
      _
    $region11: #{tpu_custom_call.1} parent=1 // pred_check_branch
      %41 = sbr.rel (0) target = $region13
    $region12: #{tpu_custom_call.1} parent=1 // pred_region
      %43 = vsyncadd [#allocation6], 0
      %s44 = sshll.u32 %s2, 4
      %s45 = int_to_ptr.hbm [resolvable:$true] %s44
      %s46 = sshll.u32 [#allocation7], 4
      %s47 = int_to_ptr.vmem [resolvable:$true] %s46
      %52 = dma.hbm_to_vmem [thread:$0]  %s45, 32, %s47, [#allocation6], 16, 16, 1
    $region13: #{tpu_custom_call.1} parent=1 // pred_fallthru
      _
    // Predicated region
    $region14: #{tpu_custom_call.1} parent=1 // pred_check
      _
    $region15: #{tpu_custom_call.1} parent=1 // pred_check_branch
      %54 = sbr.rel (0) target = $region17
    $region16: #{tpu_custom_call.1} parent=1 // pred_region
      %56 = dma.done [#allocation3], 1024
    $region17: #{tpu_custom_call.1} parent=1 // pred_fallthru
      _
    // Predicated region
    $region18: #{tpu_custom_call.1} parent=1 // pred_check
      _
    $region19: #{tpu_custom_call.1} parent=1 // pred_check_branch
      %58 = sbr.rel (0) target = $region21
    $region20: #{tpu_custom_call.1} parent=1 // pred_region
      %60 = dma.done [#allocation6], 2048
    $region21: #{tpu_custom_call.1} parent=1 // pred_fallthru
      _
    // Predicated region
    $region22: #{tpu_custom_call.1} parent=1 // pred_check
      _
    $region23: #{tpu_custom_call.1} parent=1 // pred_check_branch
      %62 = sbr.rel (0) target = $region25
    $region24: #{tpu_custom_call.1} parent=1 // pred_region
      %64 = dma.done [#allocation6], 32
    $region25: #{tpu_custom_call.1} parent=1 // pred_fallthru
      _
    %v65 = vld [vmem:[#allocation2] sm:$0xff]
    %v66 = vld [vmem:[#allocation2 + $0x8] sm:$0xff]
    %v67 = vld [vmem:[#allocation2 + $0x10] sm:$0xff]
    %v68 = vld [vmem:[#allocation2 + $0x18] sm:$0xff]
    %v69 = vld [vmem:[#allocation2 + $0x20] sm:$0xff]
    %v70 = vld [vmem:[#allocation2 + $0x28] sm:$0xff]
    %v71 = vld [vmem:[#allocation2 + $0x30] sm:$0xff]
    %v72 = vld [vmem:[#allocation2 + $0x38] sm:$0xff]
    %v73 = vpack.c.bf16 %v66, %v65
    %v74 = vpack.c.bf16 %v68, %v67
    %v75 = vpack.c.bf16 %v70, %v69
    %v76 = vpack.c.bf16 %v72, %v71
    %v77 = vld [vmem:[#allocation5] sm:$0xf]
    %v78 = vld [vmem:[#allocation5 + $0x4] sm:$0xf]
    %v79 = vld [vmem:[#allocation5 + $0x8] sm:$0xf]
    %v80 = vld [vmem:[#allocation5 + $0xc] sm:$0xf]
    %v81 = vld [vmem:[#allocation5 + $0x10] sm:$0xf]
    %v82 = vld [vmem:[#allocation5 + $0x14] sm:$0xf]
    %v83 = vld [vmem:[#allocation5 + $0x18] sm:$0xf]
    %v84 = vld [vmem:[#allocation5 + $0x1c] sm:$0xf]
    %v85 = vld [vmem:[#allocation5 + $0x20] sm:$0xf]
    %v86 = vld [vmem:[#allocation5 + $0x24] sm:$0xf]
    %v87 = vld [vmem:[#allocation5 + $0x28] sm:$0xf]
    %v88 = vld [vmem:[#allocation5 + $0x2c] sm:$0xf]
    %v89 = vld [vmem:[#allocation5 + $0x30] sm:$0xf]
    %v90 = vld [vmem:[#allocation5 + $0x34] sm:$0xf]
    %v91 = vld [vmem:[#allocation5 + $0x38] sm:$0xf]
    %v92 = vld [vmem:[#allocation5 + $0x3c] sm:$0xf]
    %v93 = vld [vmem:[#allocation7] sm:$0x1]
    %v95 = vperm.slane %v93, 0
    %v113 = vunpack.c.l.b16 %v77
    %v114 = vunpack.c.l.b16 %v78
    %v115 = vunpack.c.l.b16 %v79
    %v116 = vunpack.c.l.b16 %v80
    %v117 = vunpack.c.l.b16 %v81
    %v118 = vunpack.c.l.b16 %v82
    %v119 = vunpack.c.l.b16 %v83
    %v120 = vunpack.c.l.b16 %v84
    %v121 = vunpack.c.l.b16 %v85
    %v122 = vunpack.c.l.b16 %v86
    %v123 = vunpack.c.l.b16 %v87
    %v124 = vunpack.c.l.b16 %v88
    %v125 = vunpack.c.l.b16 %v89
    %v126 = vunpack.c.l.b16 %v90
    %v127 = vunpack.c.l.b16 %v91
    %v128 = vunpack.c.l.b16 %v92
    %v129 = vpack.c.b16 %v114, %v113
    %v130 = vpack.c.b16 %v116, %v115
    %v131 = vpack.c.b16 %v118, %v117
    %v132 = vpack.c.b16 %v120, %v119
    %v133 = vpack.c.b16 %v122, %v121
    %v134 = vpack.c.b16 %v124, %v123
    %v135 = vpack.c.b16 %v126, %v125
    %v136 = vpack.c.b16 %v128, %v127
    %145 = vmatpush.bf16.msra.mxu0 %v136
    %146 = vmatpush.bf16.msra.mxu0 %v135
    %147 = vmatpush.bf16.msra.mxu0 %v134
    %148 = vmatpush.bf16.msra.mxu0 %v133
    %149 = vmatpush.bf16.msra.mxu0 %v132
    %150 = vmatpush.bf16.msra.mxu0 %v131
    %151 = vmatpush.bf16.msra.mxu0 %v130
    %152 = vmatpush.bf16.msra.mxu0 %v129
    %153 = vmatmul.bf16.gmra.mxu0 %v73
    %v154 = vpop.f32.mrf.mxu0
    %v155 = vadd.f32 %v95, %v154
    %v156 = vpop.f32.mrf.mxu0
    %v157 = vadd.f32 %v95, %v156
    %158 = vmatmul.bf16.gmra.mxu0 %v74
    %v159 = vpop.f32.mrf.mxu0
    %v160 = vadd.f32 %v95, %v159
    %v161 = vpop.f32.mrf.mxu0
    %v162 = vadd.f32 %v95, %v161
    %163 = vmatmul.bf16.gmra.mxu0 %v75
    %v164 = vpop.f32.mrf.mxu0
    %v165 = vadd.f32 %v95, %v164
    %v166 = vpop.f32.mrf.mxu0
    %v167 = vadd.f32 %v95, %v166
    %168 = vmatmul.bf16.gmra.mxu0 %v76
    %v169 = vpop.f32.mrf.mxu0
    %v170 = vadd.f32 %v95, %v169
    %v171 = vpop.f32.mrf.mxu0
    %v172 = vadd.f32 %v95, %v171
    %173 = vdwg.mxu0
    %174 = vst [vmem:[#allocation8] sm:$0xff] %v155
    %175 = vst [vmem:[#allocation8 + $0x8] sm:$0xff] %v157
    %176 = vst [vmem:[#allocation8 + $0x10] sm:$0xff] %v160
    %177 = vst [vmem:[#allocation8 + $0x18] sm:$0xff] %v162
    %178 = vst [vmem:[#allocation8 + $0x20] sm:$0xff] %v165
    %179 = vst [vmem:[#allocation8 + $0x28] sm:$0xff] %v167
    %180 = vst [vmem:[#allocation8 + $0x30] sm:$0xff] %v170
    %181 = vst [vmem:[#allocation8 + $0x38] sm:$0xff] %v172
    %v182 = vmax.f32 %v155, 0.0
    %v183 = vmax.f32 %v157, 0.0
    %v184 = vmax.f32 %v160, 0.0
    %v185 = vmax.f32 %v162, 0.0
    %v186 = vmax.f32 %v165, 0.0
    %v187 = vmax.f32 %v167, 0.0
    %v188 = vmax.f32 %v170, 0.0
    %v189 = vmax.f32 %v172, 0.0
    %v190 = vpack.c.bf16 %v183, %v182
    %v191 = vpack.c.bf16 %v185, %v184
    %v192 = vpack.c.bf16 %v187, %v186
    %v193 = vpack.c.bf16 %v189, %v188
    %s194 = scalar_lea.vmem [#allocation5], 64
    %v195 = vld [vmem:[%s194] sm:$0xf]
    %v196 = vld [vmem:[%s194 + $0x4] sm:$0xf]
    %v197 = vld [vmem:[%s194 + $0x8] sm:$0xf]
    %v198 = vld [vmem:[%s194 + $0xc] sm:$0xf]
    %v199 = vld [vmem:[%s194 + $0x10] sm:$0xf]
    %v200 = vld [vmem:[%s194 + $0x14] sm:$0xf]
    %v201 = vld [vmem:[%s194 + $0x18] sm:$0xf]
    %v202 = vld [vmem:[%s194 + $0x1c] sm:$0xf]
    %v203 = vld [vmem:[%s194 + $0x20] sm:$0xf]
    %v204 = vld [vmem:[%s194 + $0x24] sm:$0xf]
    %v205 = vld [vmem:[%s194 + $0x28] sm:$0xf]
    %v206 = vld [vmem:[%s194 + $0x2c] sm:$0xf]
    %v207 = vld [vmem:[%s194 + $0x30] sm:$0xf]
    %v208 = vld [vmem:[%s194 + $0x34] sm:$0xf]
    %v209 = vld [vmem:[%s194 + $0x38] sm:$0xf]
    %v210 = vld [vmem:[%s194 + $0x3c] sm:$0xf]
    %s211 = scalar_lea.vmem [#allocation7], 1
    %v212 = vld [vmem:[%s211] sm:$0x1]
    %v214 = vperm.slane %v212, 0
    %v232 = vunpack.c.l.b16 %v195
    %v233 = vunpack.c.l.b16 %v196
    %v234 = vunpack.c.l.b16 %v197
    %v235 = vunpack.c.l.b16 %v198
    %v236 = vunpack.c.l.b16 %v199
    %v237 = vunpack.c.l.b16 %v200
    %v238 = vunpack.c.l.b16 %v201
    %v239 = vunpack.c.l.b16 %v202
    %v240 = vunpack.c.l.b16 %v203
    %v241 = vunpack.c.l.b16 %v204
    %v242 = vunpack.c.l.b16 %v205
    %v243 = vunpack.c.l.b16 %v206
    %v244 = vunpack.c.l.b16 %v207
    %v245 = vunpack.c.l.b16 %v208
    %v246 = vunpack.c.l.b16 %v209
    %v247 = vunpack.c.l.b16 %v210
    %v248 = vpack.c.b16 %v233, %v232
    %v249 = vpack.c.b16 %v235, %v234
    %v250 = vpack.c.b16 %v237, %v236
    %v251 = vpack.c.b16 %v239, %v238
    %v252 = vpack.c.b16 %v241, %v240
    %v253 = vpack.c.b16 %v243, %v242
    %v254 = vpack.c.b16 %v245, %v244
    %v255 = vpack.c.b16 %v247, %v246
    %264 = vmatpush.bf16.msra.mxu0 %v255
    %265 = vmatpush.bf16.msra.mxu0 %v254
    %266 = vmatpush.bf16.msra.mxu0 %v253
    %267 = vmatpush.bf16.msra.mxu0 %v252
    %268 = vmatpush.bf16.msra.mxu0 %v251
    %269 = vmatpush.bf16.msra.mxu0 %v250
    %270 = vmatpush.bf16.msra.mxu0 %v249
    %271 = vmatpush.bf16.msra.mxu0 %v248
    %272 = vmatmul.bf16.gmra.mxu0 %v190
    %v273 = vpop.f32.mrf.mxu0
    %v274 = vadd.f32 %v214, %v273
    %v275 = vpop.f32.mrf.mxu0
    %v276 = vadd.f32 %v214, %v275
    %277 = vmatmul.bf16.gmra.mxu0 %v191
    %v278 = vpop.f32.mrf.mxu0
    %v279 = vadd.f32 %v214, %v278
    %v280 = vpop.f32.mrf.mxu0
    %v281 = vadd.f32 %v214, %v280
    %282 = vmatmul.bf16.gmra.mxu0 %v192
    %v283 = vpop.f32.mrf.mxu0
    %v284 = vadd.f32 %v214, %v283
    %v285 = vpop.f32.mrf.mxu0
    %v286 = vadd.f32 %v214, %v285
    %287 = vmatmul.bf16.gmra.mxu0 %v193
    %v288 = vpop.f32.mrf.mxu0
    %v289 = vadd.f32 %v214, %v288
    %v290 = vpop.f32.mrf.mxu0
    %v291 = vadd.f32 %v214, %v290
    %292 = vdwg.mxu0
    %293 = vst [vmem:[#allocation9] sm:$0xff] %v274
    %294 = vst [vmem:[#allocation9 + $0x8] sm:$0xff] %v276
    %295 = vst [vmem:[#allocation9 + $0x10] sm:$0xff] %v279
    %296 = vst [vmem:[#allocation9 + $0x18] sm:$0xff] %v281
    %297 = vst [vmem:[#allocation9 + $0x20] sm:$0xff] %v284
    %298 = vst [vmem:[#allocation9 + $0x28] sm:$0xff] %v286
    %299 = vst [vmem:[#allocation9 + $0x30] sm:$0xff] %v289
    %300 = vst [vmem:[#allocation9 + $0x38] sm:$0xff] %v291
    // Predicated region
    $region26: #{tpu_custom_call.1} parent=1 // pred_check
      _
    $region27: #{tpu_custom_call.1} parent=1 // pred_check_branch
      %302 = sbr.rel (0) target = $region29
    $region28: #{tpu_custom_call.1} parent=1 // pred_region
      %304 = vsyncadd [#allocation4], 0
      %s305 = sshll.u32 [#allocation8], 4
      %s306 = int_to_ptr.vmem [resolvable:$true] %s305
      %s307 = sshll.u32 %s3, 4
      %s308 = int_to_ptr.hbm [resolvable:$true] %s307
      %313 = dma.vmem_to_hbm [thread:$0]  %s306, 1024, %s308, [#allocation4], 128, 128, 8
    $region29: #{tpu_custom_call.1} parent=1 // pred_fallthru
      _
    // Predicated region
    $region30: #{tpu_custom_call.1} parent=1 // pred_check
      _
    $region31: #{tpu_custom_call.1} parent=1 // pred_check_branch
      %315 = sbr.rel (0) target = $region33
    $region32: #{tpu_custom_call.1} parent=1 // pred_region
      %317 = vsyncadd [#allocation10], 0
      %s318 = sshll.u32 [#allocation9], 4
      %s319 = int_to_ptr.vmem [resolvable:$true] %s318
      %s320 = sshll.u32 %s4, 4
      %s321 = int_to_ptr.hbm [resolvable:$true] %s320
      %326 = dma.vmem_to_hbm [thread:$0]  %s319, 1024, %s321, [#allocation10], 128, 128, 8
    $region33: #{tpu_custom_call.1} parent=1 // pred_fallthru
      _
    // Predicated region
    $region34: #{tpu_custom_call.1} parent=1 // pred_check
      _
    $region35: #{tpu_custom_call.1} parent=1 // pred_check_branch
      %328 = sbr.rel (0) target = $region37
    $region36: #{tpu_custom_call.1} parent=1 // pred_region
      %330 = dma.done [#allocation4], 1024
    $region37: #{tpu_custom_call.1} parent=1 // pred_fallthru
      _
    // Predicated region
    $region38: #{tpu_custom_call.1} parent=1 // pred_check
      _
    $region39: #{tpu_custom_call.1} parent=1 // pred_check_branch
      %332 = sbr.rel (0) target = $region41
    $region40: #{tpu_custom_call.1} parent=1 // pred_region
      %334 = dma.done [#allocation10], 1024
    $region41: #{tpu_custom_call.1} parent=1 // pred_fallthru
      _
    %335 = vsyncpa [#allocation3], 1
    %336 = vsyncpa [#allocation6], 1
    %337 = vsyncpa [#allocation4], 1
    %338 = vsyncpa [#allocation10], 1

</llo_original>
